<compile_context>
chip_gen: v6e
topology: v6e:2x2x1
jax: 0.10.0
libtpu: 0.0.40
codegen_flags: <defaults>
</compile_context>

<pallas_src>
import functools

import jax
import jax.numpy as jnp
from jax.experimental import pallas as pl
from jax.experimental.pallas import tpu as pltpu


def _round_up(v, m):
    return ((v + m - 1) // m) * m


# ---------------------------------------------------------------------------
# Fast path: in_features == out_features == 1  ->  y = x * w + b  (VPU only)
# ---------------------------------------------------------------------------
_FAST_TILE_ROWS = 4096  # 4096*128*4B = 2 MiB per block


def _affine_kernel(w_ref, b_ref, x_ref, o_ref):
    # w_ref / b_ref: (1,) f32 scalars in SMEM.
    # x_ref / o_ref: (tile_rows, 128) f32 tiles in VMEM.
    o_ref[...] = x_ref[...] * w_ref[0] + b_ref[0]


@jax.jit
def _affine_forward(x, w, b):
    """y = x * w + b for x of shape (N, 1); returns (N, 1) float32."""
    n = x.shape[0]
    x_flat = x.reshape(-1).astype(jnp.float32)

    # Pad only the ragged tail (< 1024 elements) so the batch views lane-dense
    # as (rows, 128) with rows a multiple of 8.  When n is already aligned the
    # reshape is free and no extra HBM copy is made at all.
    n_pad = _round_up(max(n, 1), 8 * 128)
    if n_pad != n:
        x_flat = jnp.pad(x_flat, (0, n_pad - n))
    rows = n_pad // 128
    x2d = x_flat.reshape(rows, 128)

    if rows <= _FAST_TILE_ROWS:
        tile_rows = rows              # single block covers the whole array
    else:
        tile_rows = _FAST_TILE_ROWS   # ragged last block handled by Pallas
    grid = (pl.cdiv(rows, tile_rows),)

    out2d = pl.pallas_call(
        _affine_kernel,
        out_shape=jax.ShapeDtypeStruct((rows, 128), jnp.float32),
        grid=grid,
        in_specs=[
            pl.BlockSpec(memory_space=pltpu.MemorySpace.SMEM),   # w (1,)
            pl.BlockSpec(memory_space=pltpu.MemorySpace.SMEM),   # b (1,)
            pl.BlockSpec((tile_rows, 128), lambda i: (i, 0)),
        ],
        out_specs=pl.BlockSpec((tile_rows, 128), lambda i: (i, 0)),
        compiler_params=pltpu.CompilerParams(
            dimension_semantics=("parallel",),   # megacore split on v7x when grid >= 2
        ),
    )(w, b, x2d)

    out_flat = out2d.reshape(-1)
    if n_pad != n:
        out_flat = out_flat[:n]
    return out_flat.reshape(n, 1)


# ---------------------------------------------------------------------------
# General path: tiled MXU matmul  y = x @ W^T + b  (kept for larger layers)
# ---------------------------------------------------------------------------
def _linear_kernel(x_ref, w_ref, b_ref, o_ref):
    k = pl.program_id(2)

    @pl.when(k == 0)
    def _():
        o_ref[...] = jnp.zeros_like(o_ref)

    # bf16 operands feed the MXU at native rate on v6e/v7x (v5e handles the
    # cast cheaply too); accumulate in f32 directly in the resident output
    # block -- no separate VMEM scratch and no final acc->out copy.
    o_ref[...] += jnp.dot(x_ref[...].astype(jnp.bfloat16),
                          w_ref[...].astype(jnp.bfloat16),
                          preferred_element_type=jnp.float32)

    @pl.when(k == pl.num_programs(2) - 1)
    def _():
        o_ref[...] = o_ref[...] + b_ref[...]


@functools.partial(jax.jit, static_argnums=(3, 4, 5, 6))
def _linear_forward_padded(x, w_t, b_p, m, tm, tn, tk):
    """x (N,K) @ pre-padded w_t (Kp,Mp) + pre-padded b_p (1,Mp) -> (N,m)."""
    n, kdim = x.shape
    k_p, m_p = w_t.shape

    tm_eff = min(tm, _round_up(n, 8))
    n_p = _round_up(_round_up(n, 8), tm_eff)
    if (n_p, k_p) != (n, kdim):
        x_p = jnp.zeros((n_p, k_p), jnp.float32).at[:n, :kdim].set(
            x.astype(jnp.float32))
    else:
        x_p = x.astype(jnp.float32)   # already (8,128)-aligned: no pad copy

    out_p = pl.pallas_call(
        _linear_kernel,
        out_shape=jax.ShapeDtypeStruct((n_p, m_p), jnp.float32),
        grid=(n_p // tm_eff, m_p // tn, k_p // tk),
        in_specs=[
            pl.BlockSpec((tm_eff, tk), lambda i, j, k: (i, k)),
            pl.BlockSpec((tk, tn), lambda i, j, k: (k, j)),
            pl.BlockSpec((1, tn), lambda i, j, k: (0, j)),
        ],
        out_specs=pl.BlockSpec((tm_eff, tn), lambda i, j, k: (i, j)),
        compiler_params=pltpu.CompilerParams(
            dimension_semantics=("parallel", "parallel", "arbitrary"),
        ),
    )(x_p, w_t, b_p)

    if (n_p, m_p) != (n, m):
        out_p = out_p[:n, :m]
    return out_p


class PallasLinear:
    """General torch.nn.Linear forward; weight transposed/padded once at init."""

    def __init__(self, weight, bias, tm=512, tn=512, tk=512):
        # 512x512x512 f32 tiles: ~6-7 MiB with double buffering -- under v5e's
        # 16 MiB default scoped VMEM and v7x's 32 MiB default / 64 MiB physical.
        m, kdim = weight.shape
        self.m = m
        self.tm = tm
        self.tk = min(tk, _round_up(kdim, 128))
        self.tn = min(tn, _round_up(m, 128))
        k_p = _round_up(_round_up(kdim, 128), self.tk)
        m_p = _round_up(_round_up(m, 128), self.tn)

        w_t = weight.astype(jnp.float32).T                       # (K, M)
        if (k_p, m_p) != (kdim, m):
            w_t = jnp.zeros((k_p, m_p), jnp.float32).at[:kdim, :m].set(w_t)
        b_p = bias.astype(jnp.float32).reshape(1, m)
        if m_p != m:
            b_p = jnp.zeros((1, m_p), jnp.float32).at[0, :m].set(
                bias.astype(jnp.float32))
        self.w_t = w_t       # cached: no per-call transpose / pad traffic
        self.b_p = b_p

    def __call__(self, x):
        return _linear_forward_padded(x, self.w_t, self.b_p,
                                      self.m, self.tm, self.tn, self.tk)


class LinearRegression:
    """JAX/Pallas mirror of the PyTorch LinearRegression module."""

    def __init__(self, input_size, output_size, _x=None, _y=None):
        # Deterministic init, exactly as in the PyTorch __init__:
        # weight = [[10.0]], bias = [10.0]  (Linear(1, 1)).
        assert input_size == 1 and output_size == 1
        self.weight = jnp.array([[10.0]], dtype=jnp.float32)   # (out, in)
        self.bias = jnp.array([10.0], dtype=jnp.float32)       # (out,)
        # Hoisted, cached kernel parameters (no per-call pad / transpose).
        self._w_scalar = self.weight.reshape(-1)                # (1,)
        self._b_scalar = self.bias.reshape(-1)                  # (1,)

    def forward(self, x):
        # Elementwise VPU path: y = x * w + b.
        return _affine_forward(x, self._w_scalar, self._b_scalar)

    def get_points(self):
        return [float(self.bias[0]), float(self.weight[0, 0])]


if __name__ == "__main__":
    key = jax.random.PRNGKey(0)
    # inputSize = 1, outputSize = 1; batch of 8 samples with a single feature.
    x = jax.random.normal(key, (8, 1), dtype=jnp.float32)

    model = LinearRegression(1, 1, None, None)
    preds = jax.block_until_ready(model.forward(x))

    # Reference check: y = 10*x + 10
    ref = x * 10.0 + 10.0
    assert preds.shape == (8, 1)
    assert jnp.allclose(preds, ref, atol=1e-5), (preds, ref)
    assert model.get_points() == [10.0, 10.0]

    # Ragged batch exercising the tail-pad + slice path.
    x2 = jax.random.normal(jax.random.PRNGKey(4), (200, 1), dtype=jnp.float32)
    p2 = jax.block_until_ready(model.forward(x2))
    assert p2.shape == (200, 1)
    assert jnp.allclose(p2, x2 * 10.0 + 10.0, atol=1e-5)

    # Sanity-check the general tiled matmul path (bf16 MXU operands, f32 acc)
    # on small non-trivial shapes against a bf16-operand reference.
    xg = jax.random.normal(jax.random.PRNGKey(1), (32, 64), dtype=jnp.float32)
    wg = jax.random.normal(jax.random.PRNGKey(2), (48, 64), dtype=jnp.float32)
    bg = jax.random.normal(jax.random.PRNGKey(3), (48,), dtype=jnp.float32)
    lin = PallasLinear(wg, bg)
    yg = jax.block_until_ready(lin(xg))
    refg = jnp.dot(xg.astype(jnp.bfloat16), wg.T.astype(jnp.bfloat16),
                   preferred_element_type=jnp.float32) + bg
    assert yg.shape == (32, 48)
    assert jnp.allclose(yg, refg, atol=5e-2, rtol=5e-2)

    print("KERNEL_OK")
</pallas_src>

<mosaic_0001>
module attributes {stable_mosaic.version = 11 : i64} {
  func.func @_affine_kernel(%arg0: i32, %arg1: memref<1xf32, #tpu.memory_space<smem>>, %arg2: memref<1xf32, #tpu.memory_space<smem>>, %arg3: memref<8x128xf32, #tpu.memory_space<vmem>>, %arg4: memref<8x128xf32, #tpu.memory_space<vmem>>) attributes {dimension_semantics = [#tpu.dimension_semantics<parallel>], iteration_bounds = array<i64: 1>, scalar_prefetch = 0 : i64, scratch_operands = 0 : i64, tpu.core_type = #tpu.core_type<tc>, window_params = [{transform_indices = @transform_0, window_bounds = array<i64: 1>}, {transform_indices = @transform_1, window_bounds = array<i64: 1>}, {transform_indices = @transform_2, window_bounds = array<i64: 8, 128>}, {transform_indices = @transform_3, window_bounds = array<i64: 8, 128>}]} {
    %c0 = arith.constant 0 : index
    %c0_0 = arith.constant 0 : index
    %0 = vector.load %arg3[%c0, %c0_0] : memref<8x128xf32, #tpu.memory_space<vmem>>, vector<8x128xf32>
    %c0_1 = arith.constant 0 : index
    %1 = memref.load %arg1[%c0_1] : memref<1xf32, #tpu.memory_space<smem>>
    %2 = vector.broadcast %1 : f32 to vector<8x128xf32>
    %3 = arith.mulf %0, %2 : vector<8x128xf32>
    %c0_2 = arith.constant 0 : index
    %4 = memref.load %arg2[%c0_2] : memref<1xf32, #tpu.memory_space<smem>>
    %5 = vector.broadcast %4 : f32 to vector<8x128xf32>
    %6 = arith.addf %3, %5 : vector<8x128xf32>
    %c0_3 = arith.constant 0 : index
    %c0_4 = arith.constant 0 : index
    %7 = vector.load %arg4[%c0_3, %c0_4] : memref<8x128xf32, #tpu.memory_space<vmem>>, vector<8x128xf32>
    tpu.vector_store %arg4[%c0_3, %c0_4], %6 {strides = array<i32>} : memref<8x128xf32, #tpu.memory_space<vmem>>, vector<8x128xf32>,
    return
  }
  func.func @transform_0(%arg0: i32) -> i32 {
    %c0_i32 = arith.constant 0 : i32
    %c0_i32_0 = arith.constant 0 : i32
    return %c0_i32 : i32
  }
  func.func @transform_1(%arg0: i32) -> i32 {
    %c0_i32 = arith.constant 0 : i32
    %c0_i32_0 = arith.constant 0 : i32
    return %c0_i32 : i32
  }
  func.func @transform_2(%arg0: i32) -> (i32, i32) {
    %c0_i32 = arith.constant 0 : i32
    %c0_i32_0 = arith.constant 0 : i32
    return %arg0, %c0_i32 : i32, i32
  }
  func.func @transform_3(%arg0: i32) -> (i32, i32) {
    %c0_i32 = arith.constant 0 : i32
    %c0_i32_0 = arith.constant 0 : i32
    return %arg0, %c0_i32 : i32, i32
  }
}

</mosaic_0001>

<llo_original>
// kernel: _affine_forward.1
$region0: #{_affine_forward.1}
  #allocation0 [shape = 'u32[]', space=smem, size = 0x4, offset = 0x4, fixed_abs, tag = 'smem constant byte address 0x4 - core index']
  #allocation1 [shape = 'u32[144,128]{1,0:T(1,128)}', space=vmem, size = 0x12000, scoped, tag = 'internal scratch']
  #allocation2 [shape = 'f32[1]{0:T(128)S(6)}', space=smem, size = 0x200, scoped, tag = 'scoped memory for _affine_forward.1']
  #allocation3 [shape = 'f32[1]{0:T(128)S(6)}', space=smem, size = 0x200, scoped, tag = 'scoped memory for _affine_forward.1']
  %s0 = inlined_call_operand.<no memory space> [shape: f32[1], index: 0, kind: input, shape index: {}]
  %s1 = inlined_call_operand.<no memory space> [shape: f32[1], index: 1, kind: input, shape index: {}]
  %s2 = inlined_call_operand.vmem [shape: f32[8,128], index: 2, kind: input, shape index: {}]
  %s3 = inlined_call_operand.vmem [shape: f32[8,128], index: 3, kind: output, shape index: {}]
  %s4 = sld [smem:[#allocation0]]
  $region22: #{_affine_forward.1} parent=0
    _
  %s6 = ssub.s32 1, %s4
  %s7 = scalar_select 0, %s6, %s4
  %8 = sst [smem:[#allocation2]] %s0
  %9 = sst [smem:[#allocation3]] %s1
  // Predicated region
  $region2: #{_affine_forward.1} parent=0 // pred_check
    _
  $region3: #{_affine_forward.1} parent=0 // pred_check_branch
    %11 = sbr.rel (0) target = $region5
  $region4: #{_affine_forward.1} parent=0 // pred_region
    _
  $region5: #{_affine_forward.1} parent=0 // pred_fallthru
    _
  // Predicated region
  $region6: #{_affine_forward.1} parent=0 // pred_check
    _
  $region7: #{_affine_forward.1} parent=0 // pred_check_branch
    %13 = sbr.rel (0) target = $region9
  $region8: #{_affine_forward.1} parent=0 // pred_region
    _
  $region9: #{_affine_forward.1} parent=0 // pred_fallthru
    _
  // Predicated region
  $region10: #{_affine_forward.1} parent=0 // pred_check
    _
  $region11: #{_affine_forward.1} parent=0 // pred_check_branch
    %15 = sbr.rel (0) target = $region13
  $region12: #{_affine_forward.1} parent=0 // pred_region
    _
  $region13: #{_affine_forward.1} parent=0 // pred_fallthru
    _
  %v16 = vld [vmem:[%s2] sm:$0xff]
  %s17 = sld [smem:[#allocation2]]
  %v18 = vstv %s17
  %v19 = vmul.f32 %v16, %v18
  %s20 = sld [smem:[#allocation3]]
  %v21 = vstv %s20
  %v22 = vadd.f32 %v19, %v21
  %23 = vst [vmem:[%s3] sm:$0xff] %v22
  // Predicated region
  $region14: #{_affine_forward.1} parent=0 // pred_check
    _
  $region15: #{_affine_forward.1} parent=0 // pred_check_branch
    %25 = sbr.rel (0) target = $region17
  $region16: #{_affine_forward.1} parent=0 // pred_region
    _
  $region17: #{_affine_forward.1} parent=0 // pred_fallthru
    _
  // Predicated region
  $region18: #{_affine_forward.1} parent=0 // pred_check
    _
  $region19: #{_affine_forward.1} parent=0 // pred_check_branch
    %27 = sbr.rel (0) target = $region21
  $region20: #{_affine_forward.1} parent=0 // pred_region
    _
  $region21: #{_affine_forward.1} parent=0 // pred_fallthru
    _

</llo_original>
